<compile_context>
chip_gen: v5e
topology: v5e:2x2
jax: 0.10.0
libtpu: 0.0.40
codegen_flags: <defaults>
</compile_context>

<pallas_src>
import functools

import jax
import jax.numpy as jnp
from jax.experimental import pallas as pl
from jax.experimental.pallas import tpu as pltpu


def _ce_loss_kernel(x_ref, y_ref, out_ref, acc_ref, *, n_rows, tile_n, tiles_per_shard):
    # x_ref:   (tile_n, C)   logits tile (native dtype), VMEM
    # y_ref:   (tile_n, 1)   int32 class indices tile, VMEM
    # out_ref: (1, 8, 128)   per-shard partial-sum block (lane-dense), VMEM
    # acc_ref: (tile_n, 1)   f32 running per-row partial sums, VMEM scratch
    s = pl.program_id(0)              # shard (parallel)
    i = pl.program_id(1)              # row-tile within shard (arbitrary / reduction)

    @pl.when(i == 0)
    def _init():
        acc_ref[...] = jnp.zeros_like(acc_ref)

    x = x_ref[...].astype(jnp.float32)          # cast per tile, accumulate in f32
    y = y_ref[...]                              # (tile_n, 1) int32
    tn, c = x.shape

    # Numerically-stable per-row softmax pieces; row_max cancels when subtracting the
    # target logit, so it never needs to be re-added.
    row_max = jnp.max(x, axis=-1, keepdims=True)                     # (tn, 1)  XLU
    shifted = x - row_max                                            # (tn, C)  VPU
    sum_exp = jnp.sum(jnp.exp(shifted), axis=-1, keepdims=True)      # (tn, 1)  EUP+XLU

    # Gather shifted[r, y[r]] via a lane-index mask (no dynamic gather needed).
    col_idx = jax.lax.broadcasted_iota(jnp.int32, (tn, c), dimension=1)
    tgt_shifted = jnp.sum(jnp.where(col_idx == y, shifted, 0.0),
                          axis=-1, keepdims=True)                    # (tn, 1)

    per_example = jnp.log(sum_exp) - tgt_shifted                     # (tn, 1)

    # Mask rows beyond the true batch size (partial last tile / clamped empty tiles).
    global_tile = s * tiles_per_shard + i
    row0 = global_tile * tile_n
    row_idx = row0 + jax.lax.broadcasted_iota(jnp.int32, (tn, 1), dimension=0)
    valid = row_idx < n_rows

    # Cheap element-wise vector accumulation; no per-tile scalar reduce.
    acc_ref[...] += jnp.where(valid, per_example, 0.0)

    @pl.when(i == pl.num_programs(1) - 1)
    def _finalize():
        # Single cross-lane reduce per shard + one unmasked, lane-dense store.
        out_ref[...] = jnp.full((1, 8, 128), jnp.sum(acc_ref[...]), dtype=jnp.float32)


def _choose_tile_n(n, c, itemsize, budget_bytes=2 * 1024 * 1024, max_rows=2048):
    """Largest row tile (multiple of 8) whose logits block stays within ~budget_bytes."""
    rows = budget_bytes // max(1, c * itemsize)
    rows = max(8, min(rows, max_rows))
    rows = (rows // 8) * 8
    padded_n = ((n + 7) // 8) * 8
    return max(8, min(rows, padded_n))


def egnn_loss(x: jax.Array, y: jax.Array, *, tile_n: int | None = None) -> jax.Array:
    """Cross-entropy loss (mean reduction) over logits x [N, C] and int targets y [N]."""
    n, c = x.shape
    y2 = y.astype(jnp.int32).reshape(n, 1)

    itemsize = jnp.dtype(x.dtype).itemsize
    if tile_n is None:
        tile_n = _choose_tile_n(n, c, itemsize)
    n_tiles = pl.cdiv(n, tile_n)
    num_shards = 2 if n_tiles >= 2 else 1          # exploit both TCs on multi-core parts
    tiles_per_shard = pl.cdiv(n_tiles, num_shards)

    def tile_idx(s, i):
        # Clamp so a shard with a trailing empty tile never issues an OOB block DMA;
        # the in-kernel row mask (based on the *unclamped* index) zeroes its contribution.
        return jnp.minimum(s * tiles_per_shard + i, n_tiles - 1)

    kernel = functools.partial(
        _ce_loss_kernel, n_rows=n, tile_n=tile_n, tiles_per_shard=tiles_per_shard)

    partials = pl.pallas_call(
        kernel,
        out_shape=jax.ShapeDtypeStruct((num_shards, 8, 128), jnp.float32),
        grid=(num_shards, tiles_per_shard),
        in_specs=[
            pl.BlockSpec((tile_n, c), lambda s, i: (tile_idx(s, i), 0)),
            pl.BlockSpec((tile_n, 1), lambda s, i: (tile_idx(s, i), 0)),
        ],
        out_specs=pl.BlockSpec((1, 8, 128), lambda s, i: (s, 0, 0)),
        scratch_shapes=[pltpu.VMEM((tile_n, 1), jnp.float32)],
        compiler_params=pltpu.CompilerParams(
            dimension_semantics=("parallel", "arbitrary"),
            vmem_limit_bytes=32 * 1024 * 1024),
        cost_estimate=pl.CostEstimate(
            flops=6 * n * c,
            transcendentals=n * c,
            bytes_accessed=n * c * itemsize + n * 4 + num_shards * 8 * 128 * 4),
    )(x, y2)

    # Tiny final shard reduction + mean division in plain JAX.
    return jnp.sum(partials[:, 0, 0]) / n


def _ref_loss(x, y):
    logp = jax.nn.log_softmax(x.astype(jnp.float32), axis=-1)
    return -jnp.mean(logp[jnp.arange(x.shape[0]), y])


if __name__ == "__main__":
    key = jax.random.PRNGKey(0)

    # Test 1: small, tile-aligned shapes (batch=8, classes=32).
    k1, k2, key = jax.random.split(key, 3)
    x1 = jax.random.normal(k1, (8, 32), dtype=jnp.float32)
    y1 = jax.random.randint(k2, (8,), 0, 32, dtype=jnp.int32)
    out1 = egnn_loss(x1, y1)
    jax.block_until_ready(out1)
    assert jnp.allclose(out1, _ref_loss(x1, y1), atol=1e-5, rtol=1e-5), (out1, _ref_loss(x1, y1))

    # Test 2: batch not a multiple of 8, classes not a multiple of 128 (partial-tile mask path).
    k1, k2, key = jax.random.split(key, 3)
    x2 = jax.random.normal(k1, (13, 40), dtype=jnp.float32)
    y2 = jax.random.randint(k2, (13,), 0, 40, dtype=jnp.int32)
    out2 = egnn_loss(x2, y2)
    jax.block_until_ready(out2)
    assert jnp.allclose(out2, _ref_loss(x2, y2), atol=1e-5, rtol=1e-5), (out2, _ref_loss(x2, y2))

    # Test 3: force multiple row tiles + two grid shards (accumulator / shard-reduce path).
    k1, k2, key = jax.random.split(key, 3)
    x3 = jax.random.normal(k1, (48, 32), dtype=jnp.float32)
    y3 = jax.random.randint(k2, (48,), 0, 32, dtype=jnp.int32)
    out3 = egnn_loss(x3, y3, tile_n=8)
    jax.block_until_ready(out3)
    assert jnp.allclose(out3, _ref_loss(x3, y3), atol=1e-5, rtol=1e-5), (out3, _ref_loss(x3, y3))

    print("KERNEL_OK")
</pallas_src>

<mosaic_0001>
module attributes {stable_mosaic.version = 11 : i64} {
  func.func @_ce_loss_kernel(%arg0: i32, %arg1: i32, %arg2: memref<8x32xf32, #tpu.memory_space<vmem>>, %arg3: memref<8x1xi32, #tpu.memory_space<vmem>>, %arg4: memref<1x8x128xf32, #tpu.memory_space<vmem>>, %arg5: memref<8x1xf32, #tpu.memory_space<vmem>>) attributes {dimension_semantics = [#tpu.dimension_semantics<parallel>, #tpu.dimension_semantics<arbitrary>], iteration_bounds = array<i64: 1, 1>, scalar_prefetch = 0 : i64, scratch_operands = 1 : i64, tpu.core_type = #tpu.core_type<tc>, window_params = [{transform_indices = @transform_0, window_bounds = array<i64: 8, 32>}, {transform_indices = @transform_1, window_bounds = array<i64: 8, 1>}, {transform_indices = @transform_2, window_bounds = array<i64: 1, 8, 128>}]} {
    %c0_i32 = arith.constant 0 : i32
    %0 = arith.cmpi eq, %arg1, %c0_i32 : i32
    %1 = arith.extui %0 : i1 to i32
    %c0_i32_0 = arith.constant 0 : i32
    %2 = arith.cmpi ne, %1, %c0_i32_0 : i32
    scf.if %2 {
      %cst_15 = arith.constant 0.000000e+00 : f32
      %37 = vector.broadcast %cst_15 : f32 to vector<8x1xf32>
      %c0_16 = arith.constant 0 : index
      %c0_17 = arith.constant 0 : index
      %38 = vector.load %arg5[%c0_16, %c0_17] : memref<8x1xf32, #tpu.memory_space<vmem>>, vector<8x1xf32>
      tpu.vector_store %arg5[%c0_16, %c0_17], %37 {strides = array<i32>} : memref<8x1xf32, #tpu.memory_space<vmem>>, vector<8x1xf32>,
    } else {
    }
    %c0 = arith.constant 0 : index
    %c0_1 = arith.constant 0 : index
    %3 = vector.load %arg2[%c0, %c0_1] : memref<8x32xf32, #tpu.memory_space<vmem>>, vector<8x32xf32>
    %c0_2 = arith.constant 0 : index
    %c0_3 = arith.constant 0 : index
    %4 = vector.load %arg3[%c0_2, %c0_3] : memref<8x1xi32, #tpu.memory_space<vmem>>, vector<8x1xi32>
    %cst = arith.constant dense<0xFF800000> : vector<8xf32>
    %5 = vector.multi_reduction <maximumf>, %3, %cst [1] : vector<8x32xf32> to vector<8xf32>
    %6 = vector.shape_cast %5 : vector<8xf32> to vector<8x1xf32>
    %7 = vector.broadcast %6 : vector<8x1xf32> to vector<8x32xf32>
    %8 = arith.subf %3, %7 : vector<8x32xf32>
    %9 = math.exp %8 : vector<8x32xf32>
    %cst_4 = arith.constant dense<0.000000e+00> : vector<8xf32>
    %10 = vector.multi_reduction <add>, %9, %cst_4 [1] : vector<8x32xf32> to vector<8xf32>
    %11 = vector.shape_cast %10 : vector<8xf32> to vector<8x1xf32>
    %12 = tpu.iota {dimensions = array<i32: 1>} : vector<8x32xi32>
    %13 = vector.broadcast %4 : vector<8x1xi32> to vector<8x32xi32>
    %14 = arith.cmpi eq, %12, %13 : vector<8x32xi32>
    %cst_5 = arith.constant 0.000000e+00 : f32
    %15 = vector.broadcast %cst_5 : f32 to vector<8x32xf32>
    %16 = arith.select %14, %8, %15 : vector<8x32xi1>, vector<8x32xf32>
    %cst_6 = arith.constant dense<0.000000e+00> : vector<8xf32>
    %17 = vector.multi_reduction <add>, %16, %cst_6 [1] : vector<8x32xf32> to vector<8xf32>
    %18 = vector.shape_cast %17 : vector<8xf32> to vector<8x1xf32>
    %19 = math.log %11 : vector<8x1xf32>
    %20 = arith.subf %19, %18 : vector<8x1xf32>
    %c1_i32 = arith.constant 1 : i32
    %21 = arith.muli %arg0, %c1_i32 : i32
    %22 = arith.addi %21, %arg1 : i32
    %c8_i32 = arith.constant 8 : i32
    %23 = arith.muli %22, %c8_i32 : i32
    %24 = tpu.iota {dimensions = array<i32: 0>} : vector<8x1xi32>
    %25 = vector.broadcast %23 : i32 to vector<8x1xi32>
    %26 = arith.addi %25, %24 : vector<8x1xi32>
    %c8_i32_7 = arith.constant 8 : i32
    %27 = vector.broadcast %c8_i32_7 : i32 to vector<8x1xi32>
    %28 = arith.cmpi slt, %26, %27 : vector<8x1xi32>
    %c0_8 = arith.constant 0 : index
    %c0_9 = arith.constant 0 : index
    %29 = vector.load %arg5[%c0_8, %c0_9] : memref<8x1xf32, #tpu.memory_space<vmem>>, vector<8x1xf32>
    %cst_10 = arith.constant 0.000000e+00 : f32
    %30 = vector.broadcast %cst_10 : f32 to vector<8x1xf32>
    %31 = arith.select %28, %20, %30 : vector<8x1xi1>, vector<8x1xf32>
    %32 = arith.addf %29, %31 : vector<8x1xf32>
    %c0_11 = arith.constant 0 : index
    %c0_12 = arith.constant 0 : index
    %33 = vector.load %arg5[%c0_11, %c0_12] : memref<8x1xf32, #tpu.memory_space<vmem>>, vector<8x1xf32>
    tpu.vector_store %arg5[%c0_11, %c0_12], %32 {strides = array<i32>} : memref<8x1xf32, #tpu.memory_space<vmem>>, vector<8x1xf32>,
    %c0_i32_13 = arith.constant 0 : i32
    %34 = arith.cmpi eq, %arg1, %c0_i32_13 : i32
    %35 = arith.extui %34 : i1 to i32
    %c0_i32_14 = arith.constant 0 : i32
    %36 = arith.cmpi ne, %35, %c0_i32_14 : i32
    scf.if %36 {
      %c0_15 = arith.constant 0 : index
      %c0_16 = arith.constant 0 : index
      %37 = vector.load %arg5[%c0_15, %c0_16] : memref<8x1xf32, #tpu.memory_space<vmem>>, vector<8x1xf32>
      %38 = vector.shape_cast %37 : vector<8x1xf32> to vector<1x8x1xf32>
      %cst_17 = arith.constant dense<0.000000e+00> : vector<1xf32>
      %39 = vector.multi_reduction <add>, %38, %cst_17 [1, 2] : vector<1x8x1xf32> to vector<1xf32>
      %40 = vector.shape_cast %39 : vector<1xf32> to vector<1x1x1xf32>
      %41 = vector.extract %40[0, 0, 0] : f32 from vector<1x1x1xf32>
      %42 = vector.broadcast %41 : f32 to vector<1x8x128xf32>
      %c0_18 = arith.constant 0 : index
      %c0_19 = arith.constant 0 : index
      %c0_20 = arith.constant 0 : index
      %43 = vector.load %arg4[%c0_18, %c0_19, %c0_20] : memref<1x8x128xf32, #tpu.memory_space<vmem>>, vector<1x8x128xf32>
      tpu.vector_store %arg4[%c0_18, %c0_19, %c0_20], %42 {strides = array<i32>} : memref<1x8x128xf32, #tpu.memory_space<vmem>>, vector<1x8x128xf32>,
    } else {
    }
    return
  }
  func.func @transform_0(%arg0: i32, %arg1: i32) -> (i32, i32) {
    %c1_i32 = arith.constant 1 : i32
    %0 = arith.muli %arg0, %c1_i32 : i32
    %1 = arith.addi %0, %arg1 : i32
    %c0_i32 = arith.constant 0 : i32
    %2 = arith.minsi %1, %c0_i32 : i32
    %c0_i32_0 = arith.constant 0 : i32
    %c0_i32_1 = arith.constant 0 : i32
    return %2, %c0_i32_0 : i32, i32
  }
  func.func @transform_1(%arg0: i32, %arg1: i32) -> (i32, i32) {
    %c1_i32 = arith.constant 1 : i32
    %0 = arith.muli %arg0, %c1_i32 : i32
    %1 = arith.addi %0, %arg1 : i32
    %c0_i32 = arith.constant 0 : i32
    %2 = arith.minsi %1, %c0_i32 : i32
    %c0_i32_0 = arith.constant 0 : i32
    %c0_i32_1 = arith.constant 0 : i32
    return %2, %c0_i32_0 : i32, i32
  }
  func.func @transform_2(%arg0: i32, %arg1: i32) -> (i32, i32, i32) {
    %c0_i32 = arith.constant 0 : i32
    %c0_i32_0 = arith.constant 0 : i32
    %c0_i32_1 = arith.constant 0 : i32
    return %arg0, %c0_i32, %c0_i32_0 : i32, i32, i32
  }
}

</mosaic_0001>

<llo_original>
// kernel: tpu_custom_call.1
$region0: #{tpu_custom_call.1}
  #allocation0 [shape = 'u32[]', space=smem, size = 0x4, offset = 0x4, fixed_abs, tag = 'smem constant byte address 0x4 - core index']
  #allocation1 [shape = 'u32[72,128]{1,0:T(1,128)}', space=vmem, size = 0x9000, scoped, tag = 'internal scratch']
  #allocation2 [shape = 'f32[8,1]{1,0:T(8,128)}', space=vmem, size = 0x1000, scoped, tag = 'scratch operand']
  %s0 = inlined_call_operand.vmem [shape: f32[8,32], index: 0, kind: input, shape index: {}]
  %s1 = inlined_call_operand.vmem [shape: s32[8,1], index: 1, kind: input, shape index: {}]
  %s2 = inlined_call_operand.hbm [shape: f32[1,8,128], index: 2, kind: output, shape index: {}]
  %s3 = sld [smem:[#allocation0]]
  $region26: #{tpu_custom_call.1} parent=0
    _
  %s5 = ssub.s32 1, %s3
  %s6 = scalar_select 0, %s5, %s3
  $region1: #{tpu_custom_call.1} parent=0
    #allocation3 [shape = 'u8[4096]{0}', space=vmem, size = 0x1000, scoped, tag = 'output window, operand 0, single buffered']
    #allocation4 [shape = 's32[1]{0}', space=sflag, size = 0x4, scoped, tag = 'scoped memory for tpu_custom_call.1']
    %7 = vsyncpa [#allocation4], 0
    // Predicated region
    $region2: #{tpu_custom_call.1} parent=1 // pred_check
      _
    $region3: #{tpu_custom_call.1} parent=1 // pred_check_branch
      %9 = sbr.rel (0) target = $region5
    $region4: #{tpu_custom_call.1} parent=1 // pred_region
      %s10 = sadd.s32 0, 0
      %p11 = scmp.lt.s32.totalorder %s10, 0
      %s12 = scalar_select %p11, %s10, 0
      %p13 = scmp.lt.s32.totalorder %s12, 0
      %s14 = scalar_select %p13, %s12, 0
      %s15 = smul.addr %s14, 8
      %s16 = scalar_lea.vmem %s0, %s15
      %s17 = sadd.s32 0, 0
      %p18 = scmp.lt.s32.totalorder %s17, 0
      %s19 = scalar_select %p18, %s17, 0
    $region5: #{tpu_custom_call.1} parent=1 // pred_fallthru
      _
    // Predicated region
    $region6: #{tpu_custom_call.1} parent=1 // pred_check
      _
    $region7: #{tpu_custom_call.1} parent=1 // pred_check_branch
      %21 = sbr.rel (0) target = $region9
    $region8: #{tpu_custom_call.1} parent=1 // pred_region
      %s22 = sadd.s32 0, 0
      %p23 = scmp.lt.s32.totalorder %s22, 0
      %s24 = scalar_select %p23, %s22, 0
      %p25 = scmp.lt.s32.totalorder %s24, 0
      %s26 = scalar_select %p25, %s24, 0
      %s27 = smul.addr %s26, 8
      %s28 = scalar_lea.vmem %s1, %s27
      %s29 = sadd.s32 0, 0
      %p30 = scmp.lt.s32.totalorder %s29, 0
      %s31 = scalar_select %p30, %s29, 0
    $region9: #{tpu_custom_call.1} parent=1 // pred_fallthru
      _
    %s32 = sadd.s32 0, 0
    %p33 = scmp.lt.s32.totalorder %s32, 0
    %s34 = scalar_select %p33, %s32, 0
    %p35 = scmp.lt.s32.totalorder %s34, 0
    %s36 = scalar_select %p35, %s34, 0
    %s37 = smul.addr %s36, 8
    %s38 = scalar_lea.vmem %s0, %s37
    %s39 = sadd.s32 0, 0
    %p40 = scmp.lt.s32.totalorder %s39, 0
    %s41 = scalar_select %p40, %s39, 0
    %p42 = scmp.lt.s32.totalorder %s41, 0
    %s43 = scalar_select %p42, %s41, 0
    %s44 = smul.addr %s43, 8
    %s45 = scalar_lea.vmem %s1, %s44
    %s46 = sadd.s32 0, 0
    %p47 = scmp.lt.s32.totalorder %s46, 0
    %s48 = scalar_select %p47, %s46, 0
    %p49 = scmp.lt.s32.totalorder %s48, 0
    %s50 = scalar_select %p49, %s48, 0
    %s51 = smul.addr %s50, 8
    %s52 = scalar_lea.vmem %s0, %s51
    %s53 = sadd.s32 0, 0
    %p54 = scmp.lt.s32.totalorder %s53, 0
    %s55 = scalar_select %p54, %s53, 0
    %s56 = sadd.s32 0, 0
    %p57 = scmp.lt.s32.totalorder %s56, 0
    %s58 = scalar_select %p57, %s56, 0
    %p59 = scmp.lt.s32.totalorder %s58, 0
    %s60 = scalar_select %p59, %s58, 0
    %s61 = smul.addr %s60, 8
    %s62 = scalar_lea.vmem %s1, %s61
    %s63 = sadd.s32 0, 0
    %p64 = scmp.lt.s32.totalorder %s63, 0
    %s65 = scalar_select %p64, %s63, 0
    %p66 = scmp.eq.s32.totalorder 0, 0
    // Predicated region
    $region10: #{tpu_custom_call.1} parent=1 // pred_check
      %p67 = pneg %p66
    $region11: #{tpu_custom_call.1} parent=1 // pred_check_branch
      %69 = sbr.rel (%p67) target = $region13
    $region12: #{tpu_custom_call.1} parent=1 // pred_region
      %vm70 = vcmask 7168
      %71 = vst.msk [vmem:[#allocation2] sm:$0xff] %vm70, 0.0
    $region13: #{tpu_custom_call.1} parent=1 // pred_fallthru
      _
    %v72 = vld [vmem:[%s52] sm:$0xff]
    %v73 = vld [vmem:[%s62] sm:$0xff]
    %vm74 = vcmask 261120
    %v75 = vsel %vm74, %v72, -inf
    %76 = vmax.xlane.f32.xlu0 %v75
    %v77 = vpop.xlane.xlu0 %76
    %v78 = vsub.f32 %v72, %v77
    %v79 = vmul.f32 %v78, 1.442695
    %v80 = vpow.pop %v79
    %v81 = vsel %vm74, %v80, 0.0
    %82 = vadd.xlane.f32.xlu0 %v81
    %v83 = vpop.xlane.xlu0 %82
    %v84 = vlaneseq
    %v85 = vand.u32 %v84, 127
    %86 = vset.pattern.permute.xlu0 0
    %87 = vperm.xlu0 %86, %v73
    %v88 = vpop.permute.xlu0 %87
    %vm89 = vcmp.eq.s32.totalorder %v85, %v88
    %v90 = vsel %vm89, %v78, 0.0
    %v91 = vsel %vm74, %v90, 0.0
    %92 = vadd.xlane.f32.xlu0 %v91
    %v93 = vpop.xlane.xlu0 %92
    %v94 = vlog2.pop %v83
    %v95 = vmul.f32 %v94, 0.6931472
    %v96 = vsub.f32 %v95, %v93
    %s97 = sadd.s32 0, 0
    %s98 = smul.u32 %s97, 8
    %v99 = vlaneseq
    %v100 = vshrl.u32 %v99, 7
    %v101 = vstv %s98
    %v102 = vadd.s32 %v101, %v100
    %vm103 = vcmp.lt.s32.totalorder %v102, 8
    %v104 = vld [vmem:[#allocation2] sm:$0xff]
    %v105 = vsel %vm103, %v96, 0.0
    %v106 = vadd.f32 %v104, %v105
    %vm107 = vcmask 7168
    %108 = vst.msk [vmem:[#allocation2] sm:$0xff] %vm107, %v106
    // Predicated region
    $region14: #{tpu_custom_call.1} parent=1 // pred_check
      %p109 = pneg %p66
    $region15: #{tpu_custom_call.1} parent=1 // pred_check_branch
      %111 = sbr.rel (%p109) target = $region17
    $region16: #{tpu_custom_call.1} parent=1 // pred_region
      %v112 = vld [vmem:[#allocation2] sm:$0xff]
      %v113 = vsel %vm107, %v112, 0.0
      %114 = vadd.xlane.f32.xlu0 %v113
      %v115 = vpop.xlane.xlu0 %114
      %v116 = vrot.slane %v115, 4
      %v117 = vadd.f32 %v115, %v116
      %v118 = vrot.slane %v117, 2
      %v119 = vadd.f32 %v117, %v118
      %v120 = vrot.slane %v119, 1
      %v121 = vadd.f32 %v119, %v120
      %s122 = vtos %v121
      %v123 = vstv %s122
      %124 = vst [vmem:[#allocation3] sm:$0xff] %v123
    $region17: #{tpu_custom_call.1} parent=1 // pred_fallthru
      _
    // Predicated region
    $region18: #{tpu_custom_call.1} parent=1 // pred_check
      _
    $region19: #{tpu_custom_call.1} parent=1 // pred_check_branch
      %126 = sbr.rel (0) target = $region21
    $region20: #{tpu_custom_call.1} parent=1 // pred_region
      %128 = vsyncadd [#allocation4], 0
      %s130 = sshll.u32 [#allocation3], 4
      %s131 = int_to_ptr.vmem [resolvable:$true] %s130
      %s132 = sshll.u32 %s2, 4
      %s133 = int_to_ptr.hbm [resolvable:$true] %s132
      %135 = dma.vmem_to_hbm [thread:$0]  %s131, 128, %s133, [#allocation4]
    $region21: #{tpu_custom_call.1} parent=1 // pred_fallthru
      _
    // Predicated region
    $region22: #{tpu_custom_call.1} parent=1 // pred_check
      _
    $region23: #{tpu_custom_call.1} parent=1 // pred_check_branch
      %137 = sbr.rel (0) target = $region25
    $region24: #{tpu_custom_call.1} parent=1 // pred_region
      %139 = dma.done [#allocation4], 128
    $region25: #{tpu_custom_call.1} parent=1 // pred_fallthru
      _
    %140 = vsyncpa [#allocation4], 1

</llo_original>
